<compile_context>
chip_gen: v7x
topology: tpu7x:2x2x1
jax: 0.10.0
libtpu: 0.0.40
codegen_flags: <defaults>
</compile_context>

<pallas_src>
import jax
import jax.numpy as jnp
from jax.experimental import pallas as pl
from jax.experimental.pallas import tpu as pltpu

_LANES = 512                 # lane-dense last dim (4 x 128): unmasked wide vld/vst
_BLOCK_BYTES = 4 * 1024 * 1024   # target per-buffer block footprint (4 MiB)
_MIN_GRID = 4                # aim for >= 4 grid steps (v7x megacore sharding)


def _copy_kernel(x_ref, o_ref):
    # Pure pass-through: the reference module has no compute.
    o_ref[...] = x_ref[...]


def _round_up(n: int, m: int) -> int:
    return ((n + m - 1) // m) * m


def _sublane_min(dtype) -> int:
    """Minimum packed sublane count for a (sublane, 128) tile of this dtype."""
    itemsize = jnp.dtype(dtype).itemsize
    # 4B -> 8, 2B -> 16, 1B -> 32
    return max(8, 32 // max(1, itemsize))


def _run_identity_pallas(x: jax.Array) -> jax.Array:
    """Demo: tiled, pipelined identity copy of an arbitrary-shape tensor."""
    orig_shape = x.shape
    total = x.size
    itemsize = jnp.dtype(x.dtype).itemsize
    sub = _sublane_min(x.dtype)

    # Rows of the 2-D (rows, _LANES) slab we tile over.
    rows_needed = pl.cdiv(total, _LANES)

    # Pick tm: dtype-aware sublane multiple, <= 4 MiB per block, and (when the
    # tensor is big enough) small enough that the grid has >= _MIN_GRID steps
    # so both v7x TensorCores get work.
    max_tm = max(sub, (_BLOCK_BYTES // (_LANES * itemsize)) // sub * sub)
    tm = min(max_tm, _round_up(pl.cdiv(rows_needed, _MIN_GRID), sub))
    tm = max(tm, sub)

    rows = _round_up(rows_needed, tm)
    padded_total = rows * _LANES
    needs_pad = padded_total != total

    if needs_pad:
        flat = jnp.pad(x.reshape(-1), (0, padded_total - total))
        x2d = flat.reshape(rows, _LANES)
    else:
        # No-pad fast path: reshape is metadata-only, no extra HBM pass.
        x2d = x.reshape(rows, _LANES)

    out2d = pl.pallas_call(
        _copy_kernel,
        out_shape=jax.ShapeDtypeStruct((rows, _LANES), x2d.dtype),
        grid=(rows // tm,),
        in_specs=[pl.BlockSpec((tm, _LANES), lambda i: (i, 0))],
        out_specs=pl.BlockSpec((tm, _LANES), lambda i: (i, 0)),
        # Pure-bandwidth op: tell XLA's scheduler exactly that.
        cost_estimate=pl.CostEstimate(
            flops=0,
            transcendentals=0,
            bytes_accessed=2 * rows * _LANES * itemsize,
        ),
        compiler_params=pltpu.CompilerParams(
            # Parallel row axis: shards across v7x's 2 TensorCores, harmless
            # on single-TC v5e/v6e.
            dimension_semantics=("parallel",),
            # 2 specs x 2 buffers x 4 MiB = 16 MiB live; raise above v5e's
            # 16 MiB scoped default so the larger block lowers everywhere.
            vmem_limit_bytes=32 * 1024 * 1024,
        ),
    )(x2d)

    if needs_pad:
        return out2d.reshape(-1)[:total].reshape(orig_shape)
    return out2d.reshape(orig_shape)


def network_forward(x):
    """JAX equivalent of Network.forward: discards the input, returns None.

    No Pallas kernel is launched here — the reference performs no computation,
    so any kernel call would be pure overhead (and dead code under jit).
    """
    del x
    return None


if __name__ == "__main__":
    key = jax.random.PRNGKey(0)

    # Small NCHW input consistent with a conv-style module:
    # batch=2, channels=4, spatial 16x16 (2048 elements -> exercises pad path).
    x = jax.random.normal(key, (2, 4, 16, 16), dtype=jnp.float32)
    y = _run_identity_pallas(x)
    jax.block_until_ready(y)
    assert y.shape == x.shape and y.dtype == x.dtype
    assert jnp.array_equal(y, x), "identity kernel mismatch (pad path)"

    # Second input hitting the no-pad fast path (8 full 512-lane rows).
    x2 = jax.random.normal(key, (2, 4, 32, 16), dtype=jnp.float32)
    y2 = _run_identity_pallas(x2)
    jax.block_until_ready(y2)
    assert y2.shape == x2.shape and y2.dtype == x2.dtype
    assert jnp.array_equal(y2, x2), "identity kernel mismatch (no-pad path)"

    # Forward semantics match the PyTorch module: returns None, no kernel run.
    out = network_forward(x)
    assert out is None

    print("KERNEL_OK")
</pallas_src>

<mosaic_0001>
module attributes {stable_mosaic.version = 11 : i64} {
  func.func @_copy_kernel(%arg0: i32, %arg1: memref<8x512xf32, #tpu.memory_space<vmem>>, %arg2: memref<8x512xf32, #tpu.memory_space<vmem>>) attributes {dimension_semantics = [#tpu.dimension_semantics<parallel>], iteration_bounds = array<i64: 1>, scalar_prefetch = 0 : i64, scratch_operands = 0 : i64, tpu.core_type = #tpu.core_type<tc>, window_params = [{transform_indices = @transform_0, window_bounds = array<i64: 8, 512>}, {transform_indices = @transform_1, window_bounds = array<i64: 8, 512>}]} {
    %c0 = arith.constant 0 : index
    %c0_0 = arith.constant 0 : index
    %0 = vector.load %arg1[%c0, %c0_0] : memref<8x512xf32, #tpu.memory_space<vmem>>, vector<8x512xf32>
    %c0_1 = arith.constant 0 : index
    %c0_2 = arith.constant 0 : index
    %1 = vector.load %arg2[%c0_1, %c0_2] : memref<8x512xf32, #tpu.memory_space<vmem>>, vector<8x512xf32>
    tpu.vector_store %arg2[%c0_1, %c0_2], %0 {strides = array<i32>} : memref<8x512xf32, #tpu.memory_space<vmem>>, vector<8x512xf32>,
    return
  }
  func.func @transform_0(%arg0: i32) -> (i32, i32) {
    %c0_i32 = arith.constant 0 : i32
    %c0_i32_0 = arith.constant 0 : i32
    return %arg0, %c0_i32 : i32, i32
  }
  func.func @transform_1(%arg0: i32) -> (i32, i32) {
    %c0_i32 = arith.constant 0 : i32
    %c0_i32_0 = arith.constant 0 : i32
    return %arg0, %c0_i32 : i32, i32
  }
}

</mosaic_0001>

<llo_original>
// kernel: tpu_custom_call.1
$region0: #{tpu_custom_call.1}
  #allocation0 [shape = 'u32[]', space=smem, size = 0x4, offset = 0x4, fixed_abs, tag = 'smem constant byte address 0x4 - core index']
  #allocation1 [shape = 'u32[144,128]{1,0:T(1,128)}', space=vmem, size = 0x12000, scoped, tag = 'internal scratch']
  %s0 = inlined_call_operand.hbm [shape: f32[8,512], index: 0, kind: input, shape index: {}]
  %s1 = inlined_call_operand.hbm [shape: f32[8,512], index: 1, kind: output, shape index: {}]
  %s2 = sld [smem:[#allocation0]]
  $region18: #{tpu_custom_call.1} parent=0
    _
  %s4 = ssub.s32 1, %s2
  %s5 = scalar_select 0, %s4, %s2
  $region1: #{tpu_custom_call.1} parent=0
    #allocation2 [shape = 'u8[16384]{0}', space=vmem, size = 0x4000, scoped, tag = 'input window, operand 0, single buffered']
    #allocation3 [shape = 's32[1]{0}', space=sflag, size = 0x4, scoped, tag = 'scoped memory for tpu_custom_call.1']
    #allocation4 [shape = 's32[1]{0}', space=sflag, size = 0x4, scoped, tag = 'scoped memory for tpu_custom_call.1']
    #allocation5 [shape = 'u8[16384]{0}', space=vmem, size = 0x4000, scoped, tag = 'output window, operand 0, single buffered']
    %6 = vsyncpa [#allocation3], 0
    %7 = vsyncpa [#allocation4], 0
    // Predicated region
    $region2: #{tpu_custom_call.1} parent=1 // pred_check
      _
    $region3: #{tpu_custom_call.1} parent=1 // pred_check_branch
      %9 = sbr.rel (0) target = $region5
    $region4: #{tpu_custom_call.1} parent=1 // pred_region
      %s11 = ssub.s32 512, 512
      %12 = vsyncadd [#allocation3], %s11
      %s14 = sshll.u32 [#allocation2], 4
      %s15 = int_to_ptr.vmem [resolvable:$true] %s14
      %17 = dma.hbm_to_vmem [thread:$0]  %s0, 512, %s15, [#allocation3]
    $region5: #{tpu_custom_call.1} parent=1 // pred_fallthru
      _
    // Predicated region
    $region6: #{tpu_custom_call.1} parent=1 // pred_check
      _
    $region7: #{tpu_custom_call.1} parent=1 // pred_check_branch
      %19 = sbr.rel (0) target = $region9
    $region8: #{tpu_custom_call.1} parent=1 // pred_region
      %20 = dma.done [#allocation3], 512
    $region9: #{tpu_custom_call.1} parent=1 // pred_fallthru
      _
    %v21 = vld [vmem:[#allocation2] sm:$0xff]
    %v22 = vld [vmem:[#allocation2 + $0x8] sm:$0xff]
    %v23 = vld [vmem:[#allocation2 + $0x10] sm:$0xff]
    %v24 = vld [vmem:[#allocation2 + $0x18] sm:$0xff]
    %25 = vst [vmem:[#allocation5] sm:$0xff] %v21
    %26 = vst [vmem:[#allocation5 + $0x8] sm:$0xff] %v22
    %27 = vst [vmem:[#allocation5 + $0x10] sm:$0xff] %v23
    %28 = vst [vmem:[#allocation5 + $0x18] sm:$0xff] %v24
    // Predicated region
    $region10: #{tpu_custom_call.1} parent=1 // pred_check
      _
    $region11: #{tpu_custom_call.1} parent=1 // pred_check_branch
      %30 = sbr.rel (0) target = $region13
    $region12: #{tpu_custom_call.1} parent=1 // pred_region
      %s32 = ssub.s32 512, 512
      %33 = vsyncadd [#allocation4], %s32
      %s35 = sshll.u32 [#allocation5], 4
      %s36 = int_to_ptr.vmem [resolvable:$true] %s35
      %38 = dma.vmem_to_hbm [thread:$0]  %s36, 512, %s1, [#allocation4]
    $region13: #{tpu_custom_call.1} parent=1 // pred_fallthru
      _
    // Predicated region
    $region14: #{tpu_custom_call.1} parent=1 // pred_check
      _
    $region15: #{tpu_custom_call.1} parent=1 // pred_check_branch
      %40 = sbr.rel (0) target = $region17
    $region16: #{tpu_custom_call.1} parent=1 // pred_region
      %41 = dma.done [#allocation4], 512
    $region17: #{tpu_custom_call.1} parent=1 // pred_fallthru
      _
    %42 = vsyncpa [#allocation3], 1
    %43 = vsyncpa [#allocation4], 1

</llo_original>
